<compile_context>
chip_gen: v7x
topology: tpu7x:2x2x1
jax: 0.10.0
libtpu: 0.0.40
codegen_flags: <defaults>
</compile_context>

<pallas_src>
from typing import NamedTuple

import jax
import jax.numpy as jnp
from jax.experimental import pallas as pl
from jax.experimental.pallas import tpu as pltpu


def _round_up(x, m):
    return ((x + m - 1) // m) * m


# ---------------------------------------------------------------------------
# Per-generation tile / VMEM defaults.
# ---------------------------------------------------------------------------
_MIB = 1024 * 1024


def _tpu_tile_defaults():
    """Returns (tm_default, th_default, vmem_limit_bytes) for this chip."""
    vmem_cap = None
    kind = ""
    try:
        vmem_cap = int(pltpu.get_tpu_info().vmem_capacity_bytes)
    except Exception:
        pass
    try:
        kind = jax.devices()[0].device_kind.lower()
    except Exception:
        pass

    if vmem_cap is None:
        # Unknown: assume the smallest (v7x-like 64 MiB) and be conservative.
        vmem_cap = 128 * _MIB if ("v5" in kind or "v6" in kind) else 64 * _MIB

    if vmem_cap <= 64 * _MIB:
        # v7x: 64 MiB per TC. Leave ~8 MiB headroom for compiler scratch;
        # spend VMEM on tm (raises arithmetic intensity), not on th.
        return 512, 256, max(32 * _MIB, min(vmem_cap - 8 * _MIB, 56 * _MIB))
    if "v5" in kind:
        # v5e: ~240 FLOP/B roofline crossover -> tm=512 is already balanced.
        return 512, 512, min(100 * _MIB, vmem_cap - 16 * _MIB)
    # v6e (128 MiB physical, 32 MiB scoped default): unlock big tiles.
    return 1024, 512, min(100 * _MIB, vmem_cap - 16 * _MIB)


def _vmem_block_bytes(tm, th, Dp):
    """Rough VMEM footprint: double-buffered pipeline blocks + f32 temps."""
    return (2 * tm * Dp * 2            # x block (bf16)
            + 2 * Dp * (2 * th) * 2    # fused w1|w3 block (bf16)
            + 2 * th * Dp * 2          # w2 block (bf16)
            + 2 * tm * Dp * 4          # output / accumulator block (f32)
            + tm * (2 * th) * 4        # h13 intermediate (f32)
            + tm * th * 4)             # gated intermediate (f32)


# ---------------------------------------------------------------------------
# One-time weight packing (hoisted out of the per-call hot path).
# ---------------------------------------------------------------------------
class PackedFFNWeights(NamedTuple):
    w13: jax.Array   # (Dp, 2*Hp) bf16; hidden tile h at cols [h*2*th:(h+1)*2*th]
    w2b: jax.Array   # (Hp, Dp)   bf16
    D: int
    H: int
    Dp: int
    Hp: int
    th: int


def pack_ffn_weights(w1, w3, w2, *, th=None):
    """Pack PyTorch-layout weights (w1,w3: (H,D); w2: (D,H)) once.

    Pads feature dims to multiples of 128, transposes to (in, out) layout,
    interleaves w1|w3 per hidden tile of size th, and casts to bf16.
    """
    H, D = w1.shape
    Dp = _round_up(D, 128)
    Hp = _round_up(H, 128)

    if th is None:
        th = _tpu_tile_defaults()[1]
    th = max(128, _round_up(min(th, Hp), 128))
    while Hp % th != 0:
        th -= 128
    nh = Hp // th

    w1t = jnp.zeros((Dp, Hp), jnp.float32).at[:D, :H].set(w1.T.astype(jnp.float32))
    w3t = jnp.zeros((Dp, Hp), jnp.float32).at[:D, :H].set(w3.T.astype(jnp.float32))
    w2t = jnp.zeros((Hp, Dp), jnp.float32).at[:H, :D].set(w2.T.astype(jnp.float32))

    # Fuse w1/w3 so hidden tile h is the contiguous slab
    #   w13[:, h*2*th : (h+1)*2*th] == [w1 block h | w3 block h].
    w13 = jnp.stack(
        [w1t.reshape(Dp, nh, th), w3t.reshape(Dp, nh, th)], axis=2
    ).reshape(Dp, 2 * Hp).astype(jnp.bfloat16)
    w2b = w2t.astype(jnp.bfloat16)

    return PackedFFNWeights(w13=w13, w2b=w2b, D=D, H=H, Dp=Dp, Hp=Hp, th=th)


# ---------------------------------------------------------------------------
# Kernel
# ---------------------------------------------------------------------------
def _ffn_kernel(x_ref, w13_ref, w2_ref, o_ref):
    # x_ref:   (tm, Dp)    bf16  row tile (resident across the h axis)
    # w13_ref: (Dp, 2*th)  bf16  fused [w1 block h | w3 block h]
    # w2_ref:  (th, Dp)    bf16  w2 row block for hidden tile h
    # o_ref:   (tm, Dp)    f32   output row tile == reduction accumulator
    h = pl.program_id(1)

    @pl.when(h == 0)
    def _():
        o_ref[...] = jnp.zeros_like(o_ref)

    th = w2_ref.shape[0]

    # Single fused GEMM for the w1 and w3 projections (one MXU weight stream).
    h13 = jnp.dot(x_ref[...], w13_ref[...], preferred_element_type=jnp.float32)
    h1 = h13[:, :th]          # th static and a multiple of 128 -> aligned slices
    h3 = h13[:, th:]

    # SwiGLU gating in f32 (sigmoid -> EUP slot; mul/add -> VPU slots).
    gated = (h1 * jax.nn.sigmoid(h1)) * h3

    # Accumulate directly into the (VMEM-resident) f32 output block.
    o_ref[...] += jnp.dot(gated.astype(jnp.bfloat16), w2_ref[...],
                          preferred_element_type=jnp.float32)


# ---------------------------------------------------------------------------
# Wrapper
# ---------------------------------------------------------------------------
def feed_forward_pallas(x, packed: PackedFFNWeights, *, tm=None):
    """SwiGLU FFN forward (eval mode).

    x: (B, S, D). `packed` comes from pack_ffn_weights (call once per weights).
    Returns (B, S, D) in x.dtype.
    """
    B, S, D = x.shape
    assert D == packed.D, "x feature dim does not match packed weights"
    M = B * S
    Dp, Hp, th = packed.Dp, packed.Hp, packed.th
    nh = Hp // th

    tm_def, _, vmem_limit = _tpu_tile_defaults()
    if tm is None:
        tm = tm_def
    # Row tile: multiple of 8, no larger than the (padded) row count.
    tm = max(8, _round_up(min(tm, _round_up(M, 8)), 8))
    # Shrink tm if the pipeline blocks would blow the VMEM budget (~15% slack).
    budget = int(0.85 * vmem_limit)
    while tm > 256 and _vmem_block_bytes(tm, th, Dp) > budget:
        tm -= 256
    tm = max(8, tm)
    Mp = _round_up(M, tm)
    n_row_tiles = Mp // tm

    # bf16 x in the wrapper (halves x HBM traffic / VMEM, no per-step cast).
    x2d = jnp.zeros((Mp, Dp), jnp.bfloat16).at[:M, :D].set(
        x.reshape(M, D).astype(jnp.bfloat16))

    grid = (n_row_tiles, nh)

    # Weights are re-streamed once per row tile.
    w_bytes = packed.w13.size * 2 + packed.w2b.size * 2
    flops = 6 * Mp * Dp * Hp            # 2*M*D*(2H) fused GEMM + 2*M*H*D second GEMM
    bytes_accessed = x2d.size * 2 + Mp * Dp * 4 + n_row_tiles * w_bytes
    cost = pl.CostEstimate(flops=flops, transcendentals=Mp * Hp,
                           bytes_accessed=bytes_accessed)

    out2d = pl.pallas_call(
        _ffn_kernel,
        out_shape=jax.ShapeDtypeStruct((Mp, Dp), jnp.float32),
        grid_spec=pltpu.PrefetchScalarGridSpec(
            num_scalar_prefetch=0,
            grid=grid,
            in_specs=[
                pl.BlockSpec((tm, Dp), lambda i, h: (i, 0)),      # x row tile
                pl.BlockSpec((Dp, 2 * th), lambda i, h: (0, h)),  # fused w1|w3
                pl.BlockSpec((th, Dp), lambda i, h: (h, 0)),      # w2 block
            ],
            out_specs=pl.BlockSpec((tm, Dp), lambda i, h: (i, 0)),
        ),
        compiler_params=pltpu.CompilerParams(
            dimension_semantics=("parallel", "arbitrary"),
            vmem_limit_bytes=int(vmem_limit),
        ),
        cost_estimate=cost,
    )(x2d, packed.w13, packed.w2b)

    return out2d[:M, :D].reshape(B, S, D).astype(x.dtype)


# ---------------------------------------------------------------------------
# Reference / test harness
# ---------------------------------------------------------------------------
def _hidden_dim(dim, hidden_dim, multiple_of):
    hidden_dim = int(2 * hidden_dim / 3)
    hidden_dim = multiple_of * ((hidden_dim + multiple_of - 1) // multiple_of)
    return hidden_dim


def _init_linear_weight(key, out_features, in_features):
    # Deterministic kaiming-uniform-style init (matches nn.Linear bound).
    bound = 1.0 / jnp.sqrt(jnp.float32(in_features))
    return jax.random.uniform(
        key, (out_features, in_features), dtype=jnp.float32,
        minval=-bound, maxval=bound)


def feed_forward_reference(x, w1, w3, w2):
    # Pure-JAX f32 reference matching the PyTorch forward (eval mode).
    h1 = x @ w1.T
    h3 = x @ w3.T
    return (jax.nn.silu(h1) * h3) @ w2.T


if __name__ == "__main__":
    # Module config (small): dim=32, hidden_dim=64, multiple_of=8, dropout=0.0
    dim = 32
    hidden_dim_cfg = 64
    multiple_of = 8
    H = _hidden_dim(dim, hidden_dim_cfg, multiple_of)  # int(128/3)=42 -> 48

    key = jax.random.PRNGKey(0)
    kx, k1, k2, k3 = jax.random.split(key, 4)

    B, S = 2, 8
    x = jax.random.normal(kx, (B, S, dim), dtype=jnp.float32)

    # PyTorch stores Linear weights as (out_features, in_features).
    w1 = _init_linear_weight(k1, H, dim)   # (H, D)
    w2 = _init_linear_weight(k2, dim, H)   # (D, H)
    w3 = _init_linear_weight(k3, H, dim)   # (H, D)

    # Weight packing hoisted out of the hot path: pack once, reuse per call.
    packed = pack_ffn_weights(w1, w3, w2)

    out = feed_forward_pallas(x, packed)
    out = jax.block_until_ready(out)

    ref = feed_forward_reference(x, w1, w3, w2)
    assert out.shape == (B, S, dim)
    # bf16 matmuls with f32 accumulation: relaxed tolerance vs f32 reference.
    assert jnp.allclose(out, ref, atol=3e-2, rtol=3e-2), (
        "mismatch vs reference: max abs err = "
        f"{float(jnp.max(jnp.abs(out - ref)))}")

    print("KERNEL_OK")
</pallas_src>

<mosaic_0001>
module attributes {stable_mosaic.version = 11 : i64} {
  func.func @_ffn_kernel(%arg0: i32, %arg1: i32, %arg2: memref<16x128xbf16, #tpu.memory_space<vmem>>, %arg3: memref<128x256xbf16, #tpu.memory_space<vmem>>, %arg4: memref<128x128xbf16, #tpu.memory_space<vmem>>, %arg5: memref<16x128xf32, #tpu.memory_space<vmem>>) attributes {dimension_semantics = [#tpu.dimension_semantics<parallel>, #tpu.dimension_semantics<arbitrary>], iteration_bounds = array<i64: 1, 1>, scalar_prefetch = 0 : i64, scratch_operands = 0 : i64, tpu.core_type = #tpu.core_type<tc>, window_params = [{transform_indices = @transform_0, window_bounds = array<i64: 16, 128>}, {transform_indices = @transform_1, window_bounds = array<i64: 128, 256>}, {transform_indices = @transform_2, window_bounds = array<i64: 128, 128>}, {transform_indices = @transform_3, window_bounds = array<i64: 16, 128>}]} {
    %c0_i32 = arith.constant 0 : i32
    %0 = arith.cmpi eq, %arg1, %c0_i32 : i32
    %1 = arith.extui %0 : i1 to i32
    %c0_i32_0 = arith.constant 0 : i32
    %2 = arith.cmpi ne, %1, %c0_i32_0 : i32
    scf.if %2 {
      %cst_12 = arith.constant 0.000000e+00 : f32
      %21 = vector.broadcast %cst_12 : f32 to vector<16x128xf32>
      %c0_13 = arith.constant 0 : index
      %c0_14 = arith.constant 0 : index
      %22 = vector.load %arg5[%c0_13, %c0_14] : memref<16x128xf32, #tpu.memory_space<vmem>>, vector<16x128xf32>
      tpu.vector_store %arg5[%c0_13, %c0_14], %21 {strides = array<i32>} : memref<16x128xf32, #tpu.memory_space<vmem>>, vector<16x128xf32>,
    } else {
    }
    %c0 = arith.constant 0 : index
    %c0_1 = arith.constant 0 : index
    %3 = vector.load %arg2[%c0, %c0_1] : memref<16x128xbf16, #tpu.memory_space<vmem>>, vector<16x128xbf16>
    %c0_2 = arith.constant 0 : index
    %c0_3 = arith.constant 0 : index
    %4 = vector.load %arg3[%c0_2, %c0_3] : memref<128x256xbf16, #tpu.memory_space<vmem>>, vector<128x256xbf16>
    %cst = arith.constant dense<0.000000e+00> : vector<16x256xf32>
    %5 = tpu.matmul %3, %4, %cst {dimension_numbers = #tpu.dot_dimension_numbers<[1], [0], [0], [1], [0, 0, 1, 1], [], []>} : vector<16x128xbf16>, vector<128x256xbf16>, vector<16x256xf32> -> vector<16x256xf32>
    %6 = vector.extract_strided_slice %5 {offsets = [0, 0], sizes = [16, 128], strides = [1, 1]} : vector<16x256xf32> to vector<16x128xf32>
    %7 = vector.extract_strided_slice %5 {offsets = [0, 128], sizes = [16, 128], strides = [1, 1]} : vector<16x256xf32> to vector<16x128xf32>
    %8 = arith.negf %6 : vector<16x128xf32>
    %9 = math.exp %8 : vector<16x128xf32>
    %cst_4 = arith.constant 1.000000e+00 : f32
    %10 = vector.broadcast %cst_4 : f32 to vector<16x128xf32>
    %11 = arith.addf %10, %9 : vector<16x128xf32>
    %12 = arith.divf %10, %11 : vector<16x128xf32>
    %13 = arith.mulf %6, %12 : vector<16x128xf32>
    %14 = arith.mulf %13, %7 : vector<16x128xf32>
    %c0_5 = arith.constant 0 : index
    %c0_6 = arith.constant 0 : index
    %15 = vector.load %arg5[%c0_5, %c0_6] : memref<16x128xf32, #tpu.memory_space<vmem>>, vector<16x128xf32>
    %16 = arith.truncf %14 : vector<16x128xf32> to vector<16x128xbf16>
    %c0_7 = arith.constant 0 : index
    %c0_8 = arith.constant 0 : index
    %17 = vector.load %arg4[%c0_7, %c0_8] : memref<128x128xbf16, #tpu.memory_space<vmem>>, vector<128x128xbf16>
    %cst_9 = arith.constant dense<0.000000e+00> : vector<16x128xf32>
    %18 = tpu.matmul %16, %17, %cst_9 {dimension_numbers = #tpu.dot_dimension_numbers<[1], [0], [0], [1], [0, 0, 1, 1], [], []>} : vector<16x128xbf16>, vector<128x128xbf16>, vector<16x128xf32> -> vector<16x128xf32>
    %19 = arith.addf %15, %18 : vector<16x128xf32>
    %c0_10 = arith.constant 0 : index
    %c0_11 = arith.constant 0 : index
    %20 = vector.load %arg5[%c0_10, %c0_11] : memref<16x128xf32, #tpu.memory_space<vmem>>, vector<16x128xf32>
    tpu.vector_store %arg5[%c0_10, %c0_11], %19 {strides = array<i32>} : memref<16x128xf32, #tpu.memory_space<vmem>>, vector<16x128xf32>,
    return
  }
  func.func @transform_0(%arg0: i32, %arg1: i32) -> (i32, i32) {
    %c0_i32 = arith.constant 0 : i32
    %c0_i32_0 = arith.constant 0 : i32
    return %arg0, %c0_i32 : i32, i32
  }
  func.func @transform_1(%arg0: i32, %arg1: i32) -> (i32, i32) {
    %c0_i32 = arith.constant 0 : i32
    %c0_i32_0 = arith.constant 0 : i32
    return %c0_i32, %arg1 : i32, i32
  }
  func.func @transform_2(%arg0: i32, %arg1: i32) -> (i32, i32) {
    %c0_i32 = arith.constant 0 : i32
    %c0_i32_0 = arith.constant 0 : i32
    return %arg1, %c0_i32 : i32, i32
  }
  func.func @transform_3(%arg0: i32, %arg1: i32) -> (i32, i32) {
    %c0_i32 = arith.constant 0 : i32
    %c0_i32_0 = arith.constant 0 : i32
    return %arg0, %c0_i32 : i32, i32
  }
}

</mosaic_0001>

<llo_original>
// kernel: tpu_custom_call.1
$region0: #{tpu_custom_call.1}
  #allocation0 [shape = 'u32[]', space=smem, size = 0x4, offset = 0x4, fixed_abs, tag = 'smem constant byte address 0x4 - core index']
  #allocation1 [shape = 'u32[144,128]{1,0:T(1,128)}', space=vmem, size = 0x12000, scoped, tag = 'internal scratch']
  %s0 = inlined_call_operand.hbm [shape: bf16[16,128], index: 0, kind: input, shape index: {}]
  %s1 = inlined_call_operand.hbm [shape: bf16[128,256], index: 1, kind: input, shape index: {}]
  %s2 = inlined_call_operand.hbm [shape: bf16[128,128], index: 2, kind: input, shape index: {}]
  %s3 = inlined_call_operand.hbm [shape: f32[16,128], index: 3, kind: output, shape index: {}]
  %s4 = sld [smem:[#allocation0]]
  $region38: #{tpu_custom_call.1} parent=0
    _
  %s6 = ssub.s32 1, %s4
  %s7 = scalar_select 0, %s6, %s4
  $region1: #{tpu_custom_call.1} parent=0
    #allocation2 [shape = 'u8[4096]{0}', space=vmem, size = 0x1000, scoped, tag = 'input window, operand 0, single buffered']
    #allocation3 [shape = 's32[1]{0}', space=sflag, size = 0x4, scoped, tag = 'scoped memory for tpu_custom_call.1']
    #allocation4 [shape = 's32[1]{0}', space=sflag, size = 0x4, scoped, tag = 'scoped memory for tpu_custom_call.1']
    #allocation5 [shape = 'u8[65536]{0}', space=vmem, size = 0x10000, scoped, tag = 'input window, operand 1, single buffered']
    #allocation6 [shape = 's32[1]{0}', space=sflag, size = 0x4, scoped, tag = 'scoped memory for tpu_custom_call.1']
    #allocation7 [shape = 'u8[32768]{0}', space=vmem, size = 0x8000, scoped, tag = 'input window, operand 2, single buffered']
    #allocation8 [shape = 'u8[8192]{0}', space=vmem, size = 0x2000, scoped, tag = 'output window, operand 0, single buffered']
    %8 = vsyncpa [#allocation3], 0
    %9 = vsyncpa [#allocation6], 0
    %10 = vsyncpa [#allocation4], 0
    // Predicated region
    $region2: #{tpu_custom_call.1} parent=1 // pred_check
      _
    $region3: #{tpu_custom_call.1} parent=1 // pred_check_branch
      %12 = sbr.rel (0) target = $region5
    $region4: #{tpu_custom_call.1} parent=1 // pred_region
      %s14 = ssub.s32 128, 128
      %15 = vsyncadd [#allocation3], %s14
      %s16 = sshll.u32 [#allocation2], 4
      %s17 = int_to_ptr.vmem [resolvable:$true] %s16
      %22 = dma.hbm_to_vmem [thread:$0]  %s0, 128, %s17, [#allocation3], 64, 64, 4
    $region5: #{tpu_custom_call.1} parent=1 // pred_fallthru
      _
    // Predicated region
    $region6: #{tpu_custom_call.1} parent=1 // pred_check
      _
    $region7: #{tpu_custom_call.1} parent=1 // pred_check_branch
      %24 = sbr.rel (0) target = $region9
    $region8: #{tpu_custom_call.1} parent=1 // pred_region
      %s26 = ssub.s32 2048, 2048
      %27 = vsyncadd [#allocation6], %s26
      %s28 = sshll.u32 [#allocation5], 4
      %s29 = int_to_ptr.vmem [resolvable:$true] %s28
      %34 = dma.hbm_to_vmem [thread:$0]  %s1, 2048, %s29, [#allocation6], 128, 128, 8
    $region9: #{tpu_custom_call.1} parent=1 // pred_fallthru
      _
    // Predicated region
    $region10: #{tpu_custom_call.1} parent=1 // pred_check
      _
    $region11: #{tpu_custom_call.1} parent=1 // pred_check_branch
      %36 = sbr.rel (0) target = $region13
    $region12: #{tpu_custom_call.1} parent=1 // pred_region
      %s38 = ssub.s32 1024, 1024
      %39 = vsyncadd [#allocation6], %s38
      %s40 = sshll.u32 [#allocation7], 4
      %s41 = int_to_ptr.vmem [resolvable:$true] %s40
      %46 = dma.hbm_to_vmem [thread:$0]  %s2, 1024, %s41, [#allocation6], 64, 64, 4
    $region13: #{tpu_custom_call.1} parent=1 // pred_fallthru
      _
    // Predicated region
    $region14: #{tpu_custom_call.1} parent=1 // pred_check
      _
    $region15: #{tpu_custom_call.1} parent=1 // pred_check_branch
      %48 = sbr.rel (0) target = $region17
    $region16: #{tpu_custom_call.1} parent=1 // pred_region
      %49 = dma.done [#allocation3], 128
    $region17: #{tpu_custom_call.1} parent=1 // pred_fallthru
      _
    // Predicated region
    $region18: #{tpu_custom_call.1} parent=1 // pred_check
      _
    $region19: #{tpu_custom_call.1} parent=1 // pred_check_branch
      %51 = sbr.rel (0) target = $region21
    $region20: #{tpu_custom_call.1} parent=1 // pred_region
      %52 = dma.done [#allocation6], 2048
    $region21: #{tpu_custom_call.1} parent=1 // pred_fallthru
      _
    // Predicated region
    $region22: #{tpu_custom_call.1} parent=1 // pred_check
      _
    $region23: #{tpu_custom_call.1} parent=1 // pred_check_branch
      %54 = sbr.rel (0) target = $region25
    $region24: #{tpu_custom_call.1} parent=1 // pred_region
      %55 = dma.done [#allocation6], 1024
    $region25: #{tpu_custom_call.1} parent=1 // pred_fallthru
      _
    %p57 = scmp.eq.s32.totalorder 0, 0
    // Predicated region
    $region26: #{tpu_custom_call.1} parent=1 // pred_check
      %p58 = pneg %p57
    $region27: #{tpu_custom_call.1} parent=1 // pred_check_branch
      %60 = sbr.rel (%p58) target = $region29
    $region28: #{tpu_custom_call.1} parent=1 // pred_region
      %61 = vst [vmem:[#allocation8] sm:$0xff] 0.0
      %62 = vst [vmem:[#allocation8 + $0x8] sm:$0xff] 0.0
    $region29: #{tpu_custom_call.1} parent=1 // pred_fallthru
      _
    %v63 = vld [vmem:[#allocation2] sm:$0xf]
    %v64 = vld [vmem:[#allocation2 + $0x4] sm:$0xf]
    %v65 = vld [vmem:[#allocation5] sm:$0xff]
    %v66 = vld [vmem:[#allocation5 + $0x8] sm:$0xff]
    %v67 = vld [vmem:[#allocation5 + $0x10] sm:$0xff]
    %v68 = vld [vmem:[#allocation5 + $0x18] sm:$0xff]
    %v69 = vld [vmem:[#allocation5 + $0x20] sm:$0xff]
    %v70 = vld [vmem:[#allocation5 + $0x28] sm:$0xff]
    %v71 = vld [vmem:[#allocation5 + $0x30] sm:$0xff]
    %v72 = vld [vmem:[#allocation5 + $0x38] sm:$0xff]
    %v73 = vld [vmem:[#allocation5 + $0x40] sm:$0xff]
    %v74 = vld [vmem:[#allocation5 + $0x48] sm:$0xff]
    %v75 = vld [vmem:[#allocation5 + $0x50] sm:$0xff]
    %v76 = vld [vmem:[#allocation5 + $0x58] sm:$0xff]
    %v77 = vld [vmem:[#allocation5 + $0x60] sm:$0xff]
    %v78 = vld [vmem:[#allocation5 + $0x68] sm:$0xff]
    %v79 = vld [vmem:[#allocation5 + $0x70] sm:$0xff]
    %v80 = vld [vmem:[#allocation5 + $0x78] sm:$0xff]
    %v83 = vunpack.c.l.b16 %v63
    %v84 = vunpack.c.l.b16 %v64
    %v85 = vpack.c.b16 %v84, %v83
    %v103 = vunpack.c.l.b16 %v65
    %v104 = vunpack.c.h.b16 %v65
    %v105 = vunpack.c.l.b16 %v66
    %v106 = vunpack.c.h.b16 %v66
    %v107 = vunpack.c.l.b16 %v67
    %v108 = vunpack.c.h.b16 %v67
    %v109 = vunpack.c.l.b16 %v68
    %v110 = vunpack.c.h.b16 %v68
    %v111 = vunpack.c.l.b16 %v69
    %v112 = vunpack.c.h.b16 %v69
    %v113 = vunpack.c.l.b16 %v70
    %v114 = vunpack.c.h.b16 %v70
    %v115 = vunpack.c.l.b16 %v71
    %v116 = vunpack.c.h.b16 %v71
    %v117 = vunpack.c.l.b16 %v72
    %v118 = vunpack.c.h.b16 %v72
    %v119 = vunpack.c.l.b16 %v73
    %v120 = vunpack.c.h.b16 %v73
    %v121 = vunpack.c.l.b16 %v74
    %v122 = vunpack.c.h.b16 %v74
    %v123 = vunpack.c.l.b16 %v75
    %v124 = vunpack.c.h.b16 %v75
    %v125 = vunpack.c.l.b16 %v76
    %v126 = vunpack.c.h.b16 %v76
    %v127 = vunpack.c.l.b16 %v77
    %v128 = vunpack.c.h.b16 %v77
    %v129 = vunpack.c.l.b16 %v78
    %v130 = vunpack.c.h.b16 %v78
    %v131 = vunpack.c.l.b16 %v79
    %v132 = vunpack.c.h.b16 %v79
    %v133 = vunpack.c.l.b16 %v80
    %v134 = vunpack.c.h.b16 %v80
    %v135 = vpack.c.b16 %v105, %v103
    %v136 = vpack.c.b16 %v106, %v104
    %v137 = vpack.c.b16 %v109, %v107
    %v138 = vpack.c.b16 %v110, %v108
    %v139 = vpack.c.b16 %v113, %v111
    %v140 = vpack.c.b16 %v114, %v112
    %v141 = vpack.c.b16 %v117, %v115
    %v142 = vpack.c.b16 %v118, %v116
    %v143 = vpack.c.b16 %v121, %v119
    %v144 = vpack.c.b16 %v122, %v120
    %v145 = vpack.c.b16 %v125, %v123
    %v146 = vpack.c.b16 %v126, %v124
    %v147 = vpack.c.b16 %v129, %v127
    %v148 = vpack.c.b16 %v130, %v128
    %v149 = vpack.c.b16 %v133, %v131
    %v150 = vpack.c.b16 %v134, %v132
    %167 = vmatprep.subr.bf16.mxu0 %v136
    %168 = vmatpush1.bf16.msra.mxu0 %v135
    %169 = vmatprep.subr.bf16.mxu0 %v138
    %170 = vmatpush1.bf16.msra.mxu0 %v137
    %171 = vmatprep.subr.bf16.mxu0 %v140
    %172 = vmatpush1.bf16.msra.mxu0 %v139
    %173 = vmatprep.subr.bf16.mxu0 %v142
    %174 = vmatpush1.bf16.msra.mxu0 %v141
    %175 = vmatprep.subr.bf16.mxu0 %v144
    %176 = vmatpush1.bf16.msra.mxu0 %v143
    %177 = vmatprep.subr.bf16.mxu0 %v146
    %178 = vmatpush1.bf16.msra.mxu0 %v145
    %179 = vmatprep.subr.bf16.mxu0 %v148
    %180 = vmatpush1.bf16.msra.mxu0 %v147
    %181 = vmatprep.subr.bf16.mxu0 %v150
    %182 = vmatpush1.bf16.msra.mxu0 %v149
    %183 = vmatprep.subr.bf16.mxu0 0
    %184 = vmatpush1.bf16.msra.mxu0 0
    %185 = vmatprep.subr.bf16.mxu0 0
    %186 = vmatpush1.bf16.msra.mxu0 0
    %187 = vmatprep.subr.bf16.mxu0 0
    %188 = vmatpush1.bf16.msra.mxu0 0
    %189 = vmatprep.subr.bf16.mxu0 0
    %190 = vmatpush1.bf16.msra.mxu0 0
    %191 = vmatprep.subr.bf16.mxu0 0
    %192 = vmatpush1.bf16.msra.mxu0 0
    %193 = vmatprep.subr.bf16.mxu0 0
    %194 = vmatpush1.bf16.msra.mxu0 0
    %195 = vmatprep.subr.bf16.mxu0 0
    %196 = vmatpush1.bf16.msra.mxu0 0
    %197 = vmatprep.subr.bf16.mxu0 0
    %198 = vmatpush1.bf16.msra.mxu0 0
    %199 = vmatprep.mubr.bf16.mxu0 0
    %200 = vmatmul.mubr.bf16.gmra.mrb[0].mxu0 %v85
    %v201 = vpop.f32.mrb[0].mxu0
    %v202 = vadd.f32 0.0, %v201
    %v203 = vpop.f32.mrb[0].mxu0
    %v204 = vadd.f32 0.0, %v203
    %v205 = vpop.f32.mrb[0].mxu0
    %v206 = vadd.f32 0.0, %v205
    %v207 = vpop.f32.mrb[0].mxu0
    %v208 = vadd.f32 0.0, %v207
    %209 = vdwg.mxu0
    %v210 = vxor.u32 %v202, 2147483648
    %v211 = vxor.u32 %v206, 2147483648
    %v212 = vmul.f32 %v210, 1.442695
    %v213 = vpow.pop %v212
    %v214 = vmul.f32 %v211, 1.442695
    %v215 = vpow.pop %v214
    %v216 = vadd.f32 %v213, 1.0
    %v217 = vadd.f32 %v215, 1.0
    %v218 = vrcp.pop %v216
    %v219 = vmul.f32 1.0, %v218
    %v220 = vrcp.pop %v217
    %v221 = vmul.f32 1.0, %v220
    %v222 = vmul.f32 %v202, %v219
    %v223 = vmul.f32 %v206, %v221
    %v224 = vmul.f32 %v222, %v204
    %v225 = vmul.f32 %v223, %v208
    %v226 = vld [vmem:[#allocation8] sm:$0xff]
    %v227 = vld [vmem:[#allocation8 + $0x8] sm:$0xff]
    %v228 = vpack.c.bf16 %v225, %v224
    %v229 = vld [vmem:[#allocation7] sm:$0xf]
    %v230 = vld [vmem:[#allocation7 + $0x4] sm:$0xf]
    %v231 = vld [vmem:[#allocation7 + $0x8] sm:$0xf]
    %v232 = vld [vmem:[#allocation7 + $0xc] sm:$0xf]
    %v233 = vld [vmem:[#allocation7 + $0x10] sm:$0xf]
    %v234 = vld [vmem:[#allocation7 + $0x14] sm:$0xf]
    %v235 = vld [vmem:[#allocation7 + $0x18] sm:$0xf]
    %v236 = vld [vmem:[#allocation7 + $0x1c] sm:$0xf]
    %v237 = vld [vmem:[#allocation7 + $0x20] sm:$0xf]
    %v238 = vld [vmem:[#allocation7 + $0x24] sm:$0xf]
    %v239 = vld [vmem:[#allocation7 + $0x28] sm:$0xf]
    %v240 = vld [vmem:[#allocation7 + $0x2c] sm:$0xf]
    %v241 = vld [vmem:[#allocation7 + $0x30] sm:$0xf]
    %v242 = vld [vmem:[#allocation7 + $0x34] sm:$0xf]
    %v243 = vld [vmem:[#allocation7 + $0x38] sm:$0xf]
    %v244 = vld [vmem:[#allocation7 + $0x3c] sm:$0xf]
    %v261 = vunpack.c.l.b16 %v229
    %v262 = vunpack.c.l.b16 %v230
    %v263 = vunpack.c.l.b16 %v231
    %v264 = vunpack.c.l.b16 %v232
    %v265 = vunpack.c.l.b16 %v233
    %v266 = vunpack.c.l.b16 %v234
    %v267 = vunpack.c.l.b16 %v235
    %v268 = vunpack.c.l.b16 %v236
    %v269 = vunpack.c.l.b16 %v237
    %v270 = vunpack.c.l.b16 %v238
    %v271 = vunpack.c.l.b16 %v239
    %v272 = vunpack.c.l.b16 %v240
    %v273 = vunpack.c.l.b16 %v241
    %v274 = vunpack.c.l.b16 %v242
    %v275 = vunpack.c.l.b16 %v243
    %v276 = vunpack.c.l.b16 %v244
    %v277 = vpack.c.b16 %v262, %v261
    %v278 = vpack.c.b16 %v264, %v263
    %v279 = vpack.c.b16 %v266, %v265
    %v280 = vpack.c.b16 %v268, %v267
    %v281 = vpack.c.b16 %v270, %v269
    %v282 = vpack.c.b16 %v272, %v271
    %v283 = vpack.c.b16 %v274, %v273
    %v284 = vpack.c.b16 %v276, %v275
    %293 = vmatprep.subr.bf16.mxu0 0
    %294 = vmatpush1.bf16.msra.mxu0 %v277
    %295 = vmatprep.subr.bf16.mxu0 0
    %296 = vmatpush1.bf16.msra.mxu0 %v278
    %297 = vmatprep.subr.bf16.mxu0 0
    %298 = vmatpush1.bf16.msra.mxu0 %v279
    %299 = vmatprep.subr.bf16.mxu0 0
    %300 = vmatpush1.bf16.msra.mxu0 %v280
    %301 = vmatprep.subr.bf16.mxu0 0
    %302 = vmatpush1.bf16.msra.mxu0 %v281
    %303 = vmatprep.subr.bf16.mxu0 0
    %304 = vmatpush1.bf16.msra.mxu0 %v282
    %305 = vmatprep.subr.bf16.mxu0 0
    %306 = vmatpush1.bf16.msra.mxu0 %v283
    %307 = vmatprep.subr.bf16.mxu0 0
    %308 = vmatpush1.bf16.msra.mxu0 %v284
    %309 = vmatprep.subr.bf16.mxu0 0
    %310 = vmatpush1.bf16.msra.mxu0 0
    %311 = vmatprep.subr.bf16.mxu0 0
    %312 = vmatpush1.bf16.msra.mxu0 0
    %313 = vmatprep.subr.bf16.mxu0 0
    %314 = vmatpush1.bf16.msra.mxu0 0
    %315 = vmatprep.subr.bf16.mxu0 0
    %316 = vmatpush1.bf16.msra.mxu0 0
    %317 = vmatprep.subr.bf16.mxu0 0
    %318 = vmatpush1.bf16.msra.mxu0 0
    %319 = vmatprep.subr.bf16.mxu0 0
    %320 = vmatpush1.bf16.msra.mxu0 0
    %321 = vmatprep.subr.bf16.mxu0 0
    %322 = vmatpush1.bf16.msra.mxu0 0
    %323 = vmatprep.subr.bf16.mxu0 0
    %324 = vmatpush1.bf16.msra.mxu0 0
    %325 = vmatprep.mubr.bf16.mxu0 0
    %326 = vmatmul.mubr.bf16.gmra.mrb[0].mxu0 %v228
    %v327 = vpop.f32.mrb[0].mxu0
    %v328 = vadd.f32 0.0, %v327
    %v329 = vpop.f32.mrb[0].mxu0
    %v330 = vpop.f32.mrb[0].mxu0
    %v331 = vadd.f32 0.0, %v330
    %v332 = vpop.f32.mrb[0].mxu0
    %333 = vdwg.mxu0
    %v334 = vadd.f32 %v226, %v328
    %v335 = vadd.f32 %v227, %v331
    %336 = vst [vmem:[#allocation8] sm:$0xff] %v334
    %337 = vst [vmem:[#allocation8 + $0x8] sm:$0xff] %v335
    // Predicated region
    $region30: #{tpu_custom_call.1} parent=1 // pred_check
      _
    $region31: #{tpu_custom_call.1} parent=1 // pred_check_branch
      %339 = sbr.rel (0) target = $region33
    $region32: #{tpu_custom_call.1} parent=1 // pred_region
      %s341 = ssub.s32 256, 256
      %342 = vsyncadd [#allocation4], %s341
      %s343 = sshll.u32 [#allocation8], 4
      %s344 = int_to_ptr.vmem [resolvable:$true] %s343
      %349 = dma.vmem_to_hbm [thread:$0]  %s344, 256, %s3, [#allocation4], 128, 128, 8
    $region33: #{tpu_custom_call.1} parent=1 // pred_fallthru
      _
    // Predicated region
    $region34: #{tpu_custom_call.1} parent=1 // pred_check
      _
    $region35: #{tpu_custom_call.1} parent=1 // pred_check_branch
      %351 = sbr.rel (0) target = $region37
    $region36: #{tpu_custom_call.1} parent=1 // pred_region
      %352 = dma.done [#allocation4], 256
    $region37: #{tpu_custom_call.1} parent=1 // pred_fallthru
      _
    %353 = vsyncpa [#allocation3], 1
    %354 = vsyncpa [#allocation6], 1
    %355 = vsyncpa [#allocation4], 1

</llo_original>
